<compile_context>
chip_gen: v5e
topology: v5e:2x2
jax: 0.10.0
libtpu: 0.0.40
codegen_flags: <defaults>
</compile_context>

<pallas_src>
import functools

import jax
import jax.numpy as jnp
from jax.experimental import pallas as pl
from jax.experimental.pallas import tpu as pltpu

LANE = 128
TARGET_BLOCK_BYTES = 1 << 20  # ~1 MiB per input block (~85%+ of HBM roofline)


def _leaky_relu_kernel(x_ref, o_ref, *, leaky_slope):
    x = x_ref[...]
    zero = jnp.zeros((), dtype=x.dtype)
    slope = jnp.asarray(leaky_slope, dtype=x.dtype)
    # Exact reproduction of: x.clamp(min=0) + (slope * x).clamp(max=0)
    # (valid for any sign of slope, unlike a jnp.where(x>=0,...) rewrite).
    o_ref[...] = jnp.maximum(x, zero) + jnp.minimum(slope * x, zero)


def _choose_block_rows(rows, itemsize):
    """Pick a block row count: ~1 MiB blocks, sublane-packing aligned."""
    # Sub-32-bit dtypes pack along sublanes: f32 -> 8, bf16 -> 16, int8/fp8 -> 32.
    sublane_pack = max(8, 32 // itemsize)
    target_rows = max(sublane_pack, TARGET_BLOCK_BYTES // (LANE * itemsize))
    if rows <= target_rows:
        # Single block covering all rows (full-extent block dims are always legal).
        return rows
    return (target_rows // sublane_pack) * sublane_pack


def leaky_relu(x, leaky_slope):
    """LeakyReLU forward matching the PyTorch module semantics.

    Accepts any shape / float dtype; returns same shape / dtype.
    """
    orig_shape = x.shape
    dtype = x.dtype
    n = x.size
    itemsize = jnp.dtype(dtype).itemsize

    x_flat = jnp.ravel(x)

    # Lane-dense rows of 128 elements.
    rows = pl.cdiv(n, LANE)
    block_rows = _choose_block_rows(rows, itemsize)
    total_rows = pl.cdiv(rows, block_rows) * block_rows
    padded_n = total_rows * LANE

    needs_pad = padded_n != n
    if needs_pad:
        # Ragged tail only: zero padding is benign for max(x,0)+min(s*x,0).
        x_flat = jnp.pad(x_flat, (0, padded_n - n))

    x2d = x_flat.reshape(total_rows, LANE)
    grid = (total_rows // block_rows,)

    out2d = pl.pallas_call(
        functools.partial(_leaky_relu_kernel, leaky_slope=leaky_slope),
        out_shape=jax.ShapeDtypeStruct((total_rows, LANE), dtype),
        grid=grid,
        in_specs=[pl.BlockSpec((block_rows, LANE), lambda i: (i, 0))],
        out_specs=pl.BlockSpec((block_rows, LANE), lambda i: (i, 0)),
        compiler_params=pltpu.CompilerParams(
            dimension_semantics=("parallel",)
        ),
    )(x2d)

    out_flat = out2d.reshape(-1)
    if needs_pad:
        out_flat = out_flat[:n]
    return out_flat.reshape(orig_shape)


if __name__ == "__main__":
    key = jax.random.PRNGKey(0)
    leaky_slope = 0.1  # deterministic init of the module's only parameter

    def ref(x):
        # Reference in plain JAX (same formula as the PyTorch module).
        return jnp.maximum(x, 0.0) + jnp.minimum(leaky_slope * x, 0.0)

    # NCHW input, small shapes: batch=2, channels=4, spatial=16x16 (block-aligned path).
    x = jax.random.normal(key, (2, 4, 16, 16), dtype=jnp.float32)
    y = jax.block_until_ready(leaky_relu(x, leaky_slope))
    assert y.shape == x.shape and y.dtype == x.dtype
    assert jnp.allclose(y, ref(x), atol=1e-6, rtol=1e-6)

    # Ragged-size input to exercise the (rare) padding path.
    x2 = jax.random.normal(jax.random.PRNGKey(1), (3, 5, 7), dtype=jnp.float32)
    y2 = jax.block_until_ready(leaky_relu(x2, leaky_slope))
    assert y2.shape == x2.shape and y2.dtype == x2.dtype
    assert jnp.allclose(y2, ref(x2), atol=1e-6, rtol=1e-6)

    print("KERNEL_OK")
</pallas_src>

<mosaic_0001>
module attributes {stable_mosaic.version = 11 : i64} {
  func.func @_leaky_relu_kernel(%arg0: i32, %arg1: memref<16x128xf32, #tpu.memory_space<vmem>>, %arg2: memref<16x128xf32, #tpu.memory_space<vmem>>) attributes {dimension_semantics = [#tpu.dimension_semantics<parallel>], iteration_bounds = array<i64: 1>, scalar_prefetch = 0 : i64, scratch_operands = 0 : i64, tpu.core_type = #tpu.core_type<tc>, window_params = [{transform_indices = @transform_0, window_bounds = array<i64: 16, 128>}, {transform_indices = @transform_1, window_bounds = array<i64: 16, 128>}]} {
    %c0 = arith.constant 0 : index
    %c0_0 = arith.constant 0 : index
    %0 = vector.load %arg1[%c0, %c0_0] : memref<16x128xf32, #tpu.memory_space<vmem>>, vector<16x128xf32>
    %cst = arith.constant 0.000000e+00 : f32
    %1 = vector.broadcast %cst : f32 to vector<16x128xf32>
    %2 = arith.maximumf %0, %1 : vector<16x128xf32>
    %cst_1 = arith.constant 1.000000e-01 : f32
    %3 = vector.broadcast %cst_1 : f32 to vector<16x128xf32>
    %4 = arith.mulf %3, %0 : vector<16x128xf32>
    %cst_2 = arith.constant 0.000000e+00 : f32
    %5 = vector.broadcast %cst_2 : f32 to vector<16x128xf32>
    %6 = arith.minimumf %4, %5 : vector<16x128xf32>
    %7 = arith.addf %2, %6 : vector<16x128xf32>
    %c0_3 = arith.constant 0 : index
    %c0_4 = arith.constant 0 : index
    %8 = vector.load %arg2[%c0_3, %c0_4] : memref<16x128xf32, #tpu.memory_space<vmem>>, vector<16x128xf32>
    tpu.vector_store %arg2[%c0_3, %c0_4], %7 {strides = array<i32>} : memref<16x128xf32, #tpu.memory_space<vmem>>, vector<16x128xf32>,
    return
  }
  func.func @transform_0(%arg0: i32) -> (i32, i32) {
    %c0_i32 = arith.constant 0 : i32
    %c0_i32_0 = arith.constant 0 : i32
    return %arg0, %c0_i32 : i32, i32
  }
  func.func @transform_1(%arg0: i32) -> (i32, i32) {
    %c0_i32 = arith.constant 0 : i32
    %c0_i32_0 = arith.constant 0 : i32
    return %arg0, %c0_i32 : i32, i32
  }
}

</mosaic_0001>

<llo_original>
// kernel: tpu_custom_call.1
$region0: #{tpu_custom_call.1}
  #allocation0 [shape = 'u32[]', space=smem, size = 0x4, offset = 0x4, fixed_abs, tag = 'smem constant byte address 0x4 - core index']
  #allocation1 [shape = 'u32[72,128]{1,0:T(1,128)}', space=vmem, size = 0x9000, scoped, tag = 'internal scratch']
  %s0 = inlined_call_operand.hbm [shape: f32[16,128], index: 0, kind: input, shape index: {}]
  %s1 = inlined_call_operand.hbm [shape: f32[16,128], index: 1, kind: output, shape index: {}]
  %s2 = sld [smem:[#allocation0]]
  $region18: #{tpu_custom_call.1} parent=0
    _
  %s4 = ssub.s32 1, %s2
  %s5 = scalar_select 0, %s4, %s2
  $region1: #{tpu_custom_call.1} parent=0
    #allocation2 [shape = 'u8[8192]{0}', space=vmem, size = 0x2000, scoped, tag = 'input window, operand 0, single buffered']
    #allocation3 [shape = 's32[1]{0}', space=sflag, size = 0x4, scoped, tag = 'scoped memory for tpu_custom_call.1']
    #allocation4 [shape = 's32[1]{0}', space=sflag, size = 0x4, scoped, tag = 'scoped memory for tpu_custom_call.1']
    #allocation5 [shape = 'u8[8192]{0}', space=vmem, size = 0x2000, scoped, tag = 'output window, operand 0, single buffered']
    %6 = vsyncpa [#allocation3], 0
    %7 = vsyncpa [#allocation4], 0
    // Predicated region
    $region2: #{tpu_custom_call.1} parent=1 // pred_check
      _
    $region3: #{tpu_custom_call.1} parent=1 // pred_check_branch
      %9 = sbr.rel (0) target = $region5
    $region4: #{tpu_custom_call.1} parent=1 // pred_region
      %11 = vsyncadd [#allocation3], 0
      %s12 = sshll.u32 %s0, 4
      %s13 = int_to_ptr.hbm [resolvable:$true] %s12
      %s14 = sshll.u32 [#allocation2], 4
      %s15 = int_to_ptr.vmem [resolvable:$true] %s14
      %20 = dma.hbm_to_vmem [thread:$0]  %s13, 256, %s15, [#allocation3], 128, 128, 8
    $region5: #{tpu_custom_call.1} parent=1 // pred_fallthru
      _
    // Predicated region
    $region6: #{tpu_custom_call.1} parent=1 // pred_check
      _
    $region7: #{tpu_custom_call.1} parent=1 // pred_check_branch
      %22 = sbr.rel (0) target = $region9
    $region8: #{tpu_custom_call.1} parent=1 // pred_region
      %24 = dma.done [#allocation3], 256
    $region9: #{tpu_custom_call.1} parent=1 // pred_fallthru
      _
    %v25 = vld [vmem:[#allocation2] sm:$0xff]
    %v26 = vld [vmem:[#allocation2 + $0x8] sm:$0xff]
    %v27 = vmax.f32 %v25, 0.0
    %v28 = vmax.f32 %v26, 0.0
    %v29 = vmul.f32 %v25, 0.1
    %v30 = vmul.f32 %v26, 0.1
    %v31 = vmin.f32 %v29, 0.0
    %v32 = vmin.f32 %v30, 0.0
    %v33 = vadd.f32 %v27, %v31
    %v34 = vadd.f32 %v28, %v32
    %35 = vst [vmem:[#allocation5] sm:$0xff] %v33
    %36 = vst [vmem:[#allocation5 + $0x8] sm:$0xff] %v34
    // Predicated region
    $region10: #{tpu_custom_call.1} parent=1 // pred_check
      _
    $region11: #{tpu_custom_call.1} parent=1 // pred_check_branch
      %38 = sbr.rel (0) target = $region13
    $region12: #{tpu_custom_call.1} parent=1 // pred_region
      %40 = vsyncadd [#allocation4], 0
      %s41 = sshll.u32 [#allocation5], 4
      %s42 = int_to_ptr.vmem [resolvable:$true] %s41
      %s43 = sshll.u32 %s1, 4
      %s44 = int_to_ptr.hbm [resolvable:$true] %s43
      %49 = dma.vmem_to_hbm [thread:$0]  %s42, 256, %s44, [#allocation4], 128, 128, 8
    $region13: #{tpu_custom_call.1} parent=1 // pred_fallthru
      _
    // Predicated region
    $region14: #{tpu_custom_call.1} parent=1 // pred_check
      _
    $region15: #{tpu_custom_call.1} parent=1 // pred_check_branch
      %51 = sbr.rel (0) target = $region17
    $region16: #{tpu_custom_call.1} parent=1 // pred_region
      %53 = dma.done [#allocation4], 256
    $region17: #{tpu_custom_call.1} parent=1 // pred_fallthru
      _
    %54 = vsyncpa [#allocation3], 1
    %55 = vsyncpa [#allocation4], 1

</llo_original>
